<compile_context>
chip_gen: v7x
topology: tpu7x:2x2x1
jax: 0.10.0
libtpu: 0.0.40
codegen_flags: <defaults>
</compile_context>

<pallas_src>
import functools

import jax
import jax.numpy as jnp
from jax import lax
from jax.experimental import pallas as pl
from jax.experimental.pallas import tpu as pltpu


# ----------------------------------------------------------------------------
# pltpu.roll direction probe (run once, eagerly, before any jit tracing)
# ----------------------------------------------------------------------------
_ROLL_FORWARD = None   # True  -> pltpu.roll behaves like jnp.roll: out[i] = x[i - shift]
                       # False -> out[i] = x[i + shift]


def _detect_roll_convention():
    global _ROLL_FORWARD
    if _ROLL_FORWARD is None:
        def probe(x_ref, o_ref):
            o_ref[...] = pltpu.roll(x_ref[...], shift=1, axis=1)

        x = jnp.broadcast_to(jnp.arange(256, dtype=jnp.float32)[None, :], (8, 256))
        out = pl.pallas_call(
            probe, out_shape=jax.ShapeDtypeStruct((8, 256), jnp.float32))(x)
        _ROLL_FORWARD = bool(jax.device_get(out)[0, 0] == 255.0)
    return _ROLL_FORWARD


# ----------------------------------------------------------------------------
# Wrapper-side helpers (pure JAX glue on tiny arrays)
# ----------------------------------------------------------------------------
def _im2col3x3_t(x_nchw):
    """(N, C, H, W) -> (N, 9*C, H*W) patches of the zero-padded 3x3 window.

    Row ordering is tap-major (k = ky*3 + kx), channel-minor, so it matches
    w.reshape(9*C, Cout) of an HWIO (3, 3, C, Cout) weight.
    """
    N, C, H, W = x_nchw.shape
    xp = jnp.pad(x_nchw, ((0, 0), (0, 0), (1, 1), (1, 1)))
    taps = [xp[:, :, ky:ky + H, kx:kx + W].reshape(N, C, H * W)
            for ky in range(3) for kx in range(3)]
    return jnp.concatenate(taps, axis=1)


def _tap_masks(H, W):
    """(9, 1, H*W) f32 masks: 1 where output position p has an in-image source
    for tap (dy, dx), 0 where the zero padding applies (or the roll wrapped)."""
    P = H * W
    y = jnp.arange(P) // W
    x = jnp.arange(P) % W
    masks = []
    for dy in (-1, 0, 1):
        for dx in (-1, 0, 1):
            valid = ((y + dy >= 0) & (y + dy < H) & (x + dx >= 0) & (x + dx < W))
            masks.append(valid.astype(jnp.float32))
    return jnp.stack(masks).reshape(9, 1, P)


# ----------------------------------------------------------------------------
# Fused kernel: one grid step == one batch element, everything in VMEM/vregs
# ----------------------------------------------------------------------------
def _spade_block_kernel(*refs, P, nh, n_spade, shifts, roll_forward,
                        learned_shortcut):
    if learned_shortcut:
        (x_ref, segp_ref, mask_ref, wsh_ref, bsh_ref,
         wg0, bg0, wb0, bb0,
         wg1, bg1, wb1, bb1,
         wgs, bgs, wbs, bbs,
         w0, b0, w1, b1, wsc,
         o_ref, actv_ref) = refs
    else:
        (x_ref, segp_ref, mask_ref, wsh_ref, bsh_ref,
         wg0, bg0, wb0, bb0,
         wg1, bg1, wb1, bb1,
         w0, b0, w1, b1,
         o_ref, actv_ref) = refs

    f32 = jnp.float32

    def mm(a, b):
        return jnp.dot(a, b, preferred_element_type=f32)

    # 1) Shared 3x3 conv + ReLU of the pre-im2col'd segmap for every SPADE in a
    #    single (n_spade*nh, 9*label_nc) x (9*label_nc, P) matmul.
    actv_all = jnp.maximum(mm(wsh_ref[...], segp_ref[0]) + bsh_ref[...], 0.0)
    actv_ref[...] = actv_all.reshape(n_spade, nh, P)

    def conv3x3(v, w_ref, b_ref):
        # v: (Cin, P); w_ref: (9, Cout, Cin); b_ref: (Cout, 1)  ->  (Cout, P)
        # 3x3 'same' conv: 9 channel matmuls, tap shift applied AFTER the matmul
        # on the small (Cout, P) product as a lane roll + zero-padding mask.
        cout = w_ref.shape[1]
        acc = jnp.zeros((cout, P), f32)
        for k in range(9):
            y = mm(w_ref[k], v)                             # (Cout, P)
            s = shifts[k]
            if s != 0:
                amt = (-s if roll_forward else s) % P
                y = pltpu.roll(y, shift=amt, axis=1)
            if k != 4:                                      # center tap: mask == 1
                y = y * mask_ref[k]
            acc = acc + y
        return acc + b_ref[...]

    def inorm(v):
        # InstanceNorm2d(affine=False), biased variance, eps=1e-5, one pass.
        m = jnp.mean(v, axis=1, keepdims=True)
        ms = jnp.mean(v * v, axis=1, keepdims=True)
        return (v - m) * lax.rsqrt(ms - m * m + 1e-5)

    def leaky(v):
        return jnp.where(v >= 0.0, v, 0.2 * v)

    x = x_ref[0].astype(f32)                                # (fin, P)
    xn = inorm(x)                                           # shared by norm_0 / norm_s

    # norm_0 -> LeakyReLU(0.2) -> conv_0
    a0 = actv_ref[0]
    g0 = conv3x3(a0, wg0, bg0)
    be0 = conv3x3(a0, wb0, bb0)
    d0 = leaky(xn * (1.0 + g0) + be0)
    dx0 = conv3x3(d0, w0, b0)                               # (fmid, P)

    # norm_1 -> LeakyReLU(0.2) -> conv_1
    a1 = actv_ref[1]
    g1 = conv3x3(a1, wg1, bg1)
    be1 = conv3x3(a1, wb1, bb1)
    d1 = leaky(inorm(dx0) * (1.0 + g1) + be1)
    dx1 = conv3x3(d1, w1, b1)                               # (fout, P)

    # shortcut (norm_s -> 1x1 conv, no bias, no activation) fused in
    if learned_shortcut:
        as_ = actv_ref[2]
        gs = conv3x3(as_, wgs, bgs)
        bes = conv3x3(as_, wbs, bbs)
        xs = mm(wsc[...], xn * (1.0 + gs) + bes)            # (fout, P)
    else:
        xs = x

    o_ref[0] = (xs + dx1).astype(o_ref.dtype)


# ----------------------------------------------------------------------------
# Wrapper
# ----------------------------------------------------------------------------
def spade_resnet_block(x, seg, params, learned_shortcut):
    """x: (N, fin, H, W), seg: (N, label_nc, Hs, Ws) -> (N, fout, H, W). NCHW."""
    N, fin, H, W = x.shape
    label_nc, Hs, Ws = seg.shape[1], seg.shape[2], seg.shape[3]
    P = H * W
    nh = params["norm_0"]["w_shared"].shape[-1]
    fout = params["w1"].shape[-1]
    n_spade = 3 if learned_shortcut else 2
    roll_forward = _detect_roll_convention()

    # F.interpolate(mode='nearest') to (H, W): pure index gather (JAX glue),
    # then im2col of the tiny resized segmap (shared by all three SPADEs).
    ih = (jnp.arange(H) * Hs) // H
    iw = (jnp.arange(W) * Ws) // W
    seg_r = seg[:, :, ih][:, :, :, iw]                      # (N, label_nc, H, W)
    segp = _im2col3x3_t(seg_r)                              # (N, 9*label_nc, P)

    x_flat = x.reshape(N, fin, P)
    masks = _tap_masks(H, W)                                # (9, 1, P)
    shifts = tuple(dy * W + dx for dy in (-1, 0, 1) for dx in (-1, 0, 1))

    def t9(w):                                              # HWIO (3,3,Ci,Co) -> (9, Co, Ci)
        return w.reshape(9, w.shape[2], w.shape[3]).transpose(0, 2, 1)

    def col(b):
        return b.reshape(-1, 1)

    spades = [params["norm_0"], params["norm_1"]]
    if learned_shortcut:
        spades.append(params["norm_s"])

    wsh_all = jnp.concatenate(
        [p["w_shared"].reshape(9 * label_nc, nh).T for p in spades], axis=0)
    bsh_all = jnp.concatenate([col(p["b_shared"]) for p in spades], axis=0)

    args = [x_flat, segp, masks, wsh_all, bsh_all]
    for p in spades:
        args += [t9(p["w_gamma"]), col(p["b_gamma"]),
                 t9(p["w_beta"]), col(p["b_beta"])]
    args += [t9(params["w0"]), col(params["b0"]),
             t9(params["w1"]), col(params["b1"])]
    if learned_shortcut:
        args.append(params["w_s"].T)                        # (fout, fin)

    def batched(a):
        return pl.BlockSpec((1,) + a.shape[1:], lambda n: (n, 0, 0))

    def const(a):
        z = (0,) * a.ndim
        return pl.BlockSpec(a.shape, lambda n, _z=z: _z)

    in_specs = [batched(x_flat), batched(segp)] + [const(a) for a in args[2:]]

    kernel = functools.partial(
        _spade_block_kernel, P=P, nh=nh, n_spade=n_spade, shifts=shifts,
        roll_forward=roll_forward, learned_shortcut=learned_shortcut)

    out = pl.pallas_call(
        kernel,
        out_shape=jax.ShapeDtypeStruct((N, fout, P), jnp.float32),
        grid=(N,),
        in_specs=in_specs,
        out_specs=pl.BlockSpec((1, fout, P), lambda n: (n, 0, 0)),
        scratch_shapes=[pltpu.VMEM((n_spade, nh, P), jnp.float32)],
        compiler_params=pltpu.CompilerParams(
            dimension_semantics=("parallel",)),
    )(*args)
    return out.reshape(N, fout, H, W)


# ----------------------------------------------------------------------------
# Deterministic parameter init (synthetic; shapes from the module __init__)
# ----------------------------------------------------------------------------
def init_params(key, fin, fout, label_nc, nhidden=64):
    fmiddle = min(fin, fout)
    keys = jax.random.split(key, 8)

    def conv_w(k, cin, cout, ks=3):
        fan_in = cin * ks * ks
        return (jax.random.normal(k, (ks, ks, cin, cout), jnp.float32)
                / jnp.sqrt(jnp.float32(fan_in)))

    def bias(k, cout):
        return jax.random.normal(k, (cout,), jnp.float32) * 0.01

    def spade_params(k, norm_nc):
        ks = jax.random.split(k, 6)
        return {
            "w_shared": conv_w(ks[0], label_nc, nhidden),
            "b_shared": bias(ks[1], nhidden),
            "w_gamma": conv_w(ks[2], nhidden, norm_nc),
            "b_gamma": bias(ks[3], norm_nc),
            "w_beta": conv_w(ks[4], nhidden, norm_nc),
            "b_beta": bias(ks[5], norm_nc),
        }

    params = {
        "w0": conv_w(keys[0], fin, fmiddle),
        "b0": bias(keys[1], fmiddle),
        "w1": conv_w(keys[2], fmiddle, fout),
        "b1": bias(keys[3], fout),
        "norm_0": spade_params(keys[4], fin),
        "norm_1": spade_params(keys[5], fmiddle),
    }
    if fin != fout:
        params["w_s"] = (jax.random.normal(keys[6], (fin, fout), jnp.float32)
                         / jnp.sqrt(jnp.float32(fin)))
        params["norm_s"] = spade_params(keys[7], fin)
    return params


# ----------------------------------------------------------------------------
# Pure-JAX reference (NCHW) for the correctness check
# ----------------------------------------------------------------------------
def _ref_conv3x3(x, w, b):
    y = lax.conv_general_dilated(x, w, (1, 1), "SAME",
                                 dimension_numbers=("NCHW", "HWIO", "NCHW"))
    return y + b.reshape(1, -1, 1, 1)


def _ref_instance_norm(x, eps=1e-5):
    mean = jnp.mean(x, axis=(2, 3), keepdims=True)
    var = jnp.mean(jnp.square(x - mean), axis=(2, 3), keepdims=True)
    return (x - mean) / jnp.sqrt(var + eps)


def _ref_spade(x, seg_r, p):
    actv = jax.nn.relu(_ref_conv3x3(seg_r, p["w_shared"], p["b_shared"]))
    gamma = _ref_conv3x3(actv, p["w_gamma"], p["b_gamma"])
    beta = _ref_conv3x3(actv, p["w_beta"], p["b_beta"])
    return _ref_instance_norm(x) * (1.0 + gamma) + beta


def _ref_block(x, seg, params, learned_shortcut):
    N, _, H, W = x.shape
    Hs, Ws = seg.shape[2], seg.shape[3]
    ih = (jnp.arange(H) * Hs) // H
    iw = (jnp.arange(W) * Ws) // W
    seg_r = seg[:, :, ih][:, :, :, iw]
    lrelu = lambda v: jnp.where(v >= 0.0, v, 0.2 * v)

    if learned_shortcut:
        x_s = jnp.einsum("nchw,cd->ndhw",
                         _ref_spade(x, seg_r, params["norm_s"]), params["w_s"])
    else:
        x_s = x
    dx = _ref_conv3x3(lrelu(_ref_spade(x, seg_r, params["norm_0"])),
                      params["w0"], params["b0"])
    dx = _ref_conv3x3(lrelu(_ref_spade(dx, seg_r, params["norm_1"])),
                      params["w1"], params["b1"])
    return x_s + dx


# ----------------------------------------------------------------------------
if __name__ == "__main__":
    N, fin, fout, label_nc = 2, 4, 8, 3     # fin != fout -> learned shortcut path
    H = W = 16
    Hs = Ws = 8                              # seg is nearest-upsampled to 16x16

    key = jax.random.PRNGKey(0)
    kx, ks, kp = jax.random.split(key, 3)
    x = jax.random.normal(kx, (N, fin, H, W), jnp.float32)          # NCHW
    seg = jax.random.normal(ks, (N, label_nc, Hs, Ws), jnp.float32)  # NCHW

    params = init_params(kp, fin, fout, label_nc)
    learned_shortcut = fin != fout

    _detect_roll_convention()     # resolve roll direction once, outside jit

    fwd = jax.jit(spade_resnet_block, static_argnums=(3,))
    out = jax.block_until_ready(fwd(x, seg, params, learned_shortcut))
    assert out.shape == (N, fout, H, W)

    ref = jax.block_until_ready(_ref_block(x, seg, params, learned_shortcut))
    max_err = float(jnp.max(jnp.abs(out - ref)))
    assert jnp.allclose(out, ref, rtol=2e-3, atol=2e-3), max_err

    print("KERNEL_OK")
</pallas_src>

<mosaic_0001>
module attributes {stable_mosaic.version = 11 : i64} {
  func.func @probe(%arg0: memref<8x256xf32, #tpu.memory_space<vmem>>, %arg1: memref<8x256xf32, #tpu.memory_space<vmem>>) attributes {dimension_semantics = [], scalar_prefetch = 0 : i64, scratch_operands = 0 : i64, tpu.core_type = #tpu.core_type<tc>} {
    %c0 = arith.constant 0 : index
    %c0_0 = arith.constant 0 : index
    %0 = vector.load %arg0[%c0, %c0_0] : memref<8x256xf32, #tpu.memory_space<vmem>>, vector<8x256xf32>
    %c1_i32 = arith.constant 1 : i32
    %1 = tpu.dynamic_rotate %0 by %c1_i32 dim 1 : vector<8x256xf32>, i32 -> vector<8x256xf32>
    %c0_1 = arith.constant 0 : index
    %c0_2 = arith.constant 0 : index
    %2 = vector.load %arg1[%c0_1, %c0_2] : memref<8x256xf32, #tpu.memory_space<vmem>>, vector<8x256xf32>
    tpu.vector_store %arg1[%c0_1, %c0_2], %1 {strides = array<i32>} : memref<8x256xf32, #tpu.memory_space<vmem>>, vector<8x256xf32>,
    return
  }
}

</mosaic_0001>

<llo_original>
// kernel: tpu_custom_call.1
$region0: #{tpu_custom_call.1}
  #allocation0 [shape = 'u32[]', space=smem, size = 0x4, offset = 0x4, fixed_abs, tag = 'smem constant byte address 0x4 - core index']
  #allocation1 [shape = 'u32[144,128]{1,0:T(1,128)}', space=vmem, size = 0x12000, scoped, tag = 'internal scratch']
  %s0 = inlined_call_operand.hbm [shape: f32[8,256], index: 0, kind: input, shape index: {}]
  %s1 = inlined_call_operand.hbm [shape: f32[8,256], index: 1, kind: output, shape index: {}]
  %s2 = sld [smem:[#allocation0]]
  $region18: #{tpu_custom_call.1} parent=0
    _
  %s4 = ssub.s32 1, %s2
  %s5 = scalar_select 0, %s4, %s2
  $region1: #{tpu_custom_call.1} parent=0
    #allocation2 [shape = 'u8[8192]{0}', space=vmem, size = 0x2000, scoped, tag = 'input window, operand 0, single buffered']
    #allocation3 [shape = 's32[1]{0}', space=sflag, size = 0x4, scoped, tag = 'scoped memory for tpu_custom_call.1']
    #allocation4 [shape = 's32[1]{0}', space=sflag, size = 0x4, scoped, tag = 'scoped memory for tpu_custom_call.1']
    #allocation5 [shape = 'u8[8192]{0}', space=vmem, size = 0x2000, scoped, tag = 'output window, operand 0, single buffered']
    %6 = vsyncpa [#allocation3], 0
    %7 = vsyncpa [#allocation4], 0
    // Predicated region
    $region2: #{tpu_custom_call.1} parent=1 // pred_check
      _
    $region3: #{tpu_custom_call.1} parent=1 // pred_check_branch
      %9 = sbr.rel (0) target = $region5
    $region4: #{tpu_custom_call.1} parent=1 // pred_region
      %s11 = ssub.s32 256, 256
      %12 = vsyncadd [#allocation3], %s11
      %s14 = sshll.u32 [#allocation2], 4
      %s15 = int_to_ptr.vmem [resolvable:$true] %s14
      %17 = dma.hbm_to_vmem [thread:$0]  %s0, 256, %s15, [#allocation3]
    $region5: #{tpu_custom_call.1} parent=1 // pred_fallthru
      _
    // Predicated region
    $region6: #{tpu_custom_call.1} parent=1 // pred_check
      _
    $region7: #{tpu_custom_call.1} parent=1 // pred_check_branch
      %19 = sbr.rel (0) target = $region9
    $region8: #{tpu_custom_call.1} parent=1 // pred_region
      %20 = dma.done [#allocation3], 256
    $region9: #{tpu_custom_call.1} parent=1 // pred_fallthru
      _
    %v21 = vld [vmem:[#allocation2] sm:$0xff]
    %v22 = vld [vmem:[#allocation2 + $0x8] sm:$0xff]
    %23 = vrot.lane.b32.xlu0 %v21, 1
    %v24 = vpop.permute.xlu0 %23
    %25 = vrot.lane.b32.xlu0 %v22, 1
    %v26 = vpop.permute.xlu0 %25
    %v27 = vlaneseq
    %v28 = vand.u32 %v27, 127
    %vm29 = vcmp.lt.s32.totalorder %v28, 1
    %v30 = vsel %vm29, %v24, %v26
    %v31 = vsel %vm29, %v26, %v24
    %32 = vst [vmem:[#allocation5] sm:$0xff] %v31
    %33 = vst [vmem:[#allocation5 + $0x8] sm:$0xff] %v30
    // Predicated region
    $region10: #{tpu_custom_call.1} parent=1 // pred_check
      _
    $region11: #{tpu_custom_call.1} parent=1 // pred_check_branch
      %35 = sbr.rel (0) target = $region13
    $region12: #{tpu_custom_call.1} parent=1 // pred_region
      %s37 = ssub.s32 256, 256
      %38 = vsyncadd [#allocation4], %s37
      %s40 = sshll.u32 [#allocation5], 4
      %s41 = int_to_ptr.vmem [resolvable:$true] %s40
      %43 = dma.vmem_to_hbm [thread:$0]  %s41, 256, %s1, [#allocation4]
    $region13: #{tpu_custom_call.1} parent=1 // pred_fallthru
      _
    // Predicated region
    $region14: #{tpu_custom_call.1} parent=1 // pred_check
      _
    $region15: #{tpu_custom_call.1} parent=1 // pred_check_branch
      %45 = sbr.rel (0) target = $region17
    $region16: #{tpu_custom_call.1} parent=1 // pred_region
      %46 = dma.done [#allocation4], 256
    $region17: #{tpu_custom_call.1} parent=1 // pred_fallthru
      _
    %47 = vsyncpa [#allocation3], 1
    %48 = vsyncpa [#allocation4], 1

</llo_original>
